<compile_context>
chip_gen: v7x
topology: tpu7x:2x2x1
jax: 0.10.0
libtpu: 0.0.40
codegen_flags: <defaults>
</compile_context>

<pallas_src>
from collections import namedtuple
import functools

import jax
import jax.numpy as jnp
import numpy as np
from jax import lax
from jax.experimental import pallas as pl
from jax.experimental.pallas import tpu as pltpu

FeatureConfig = namedtuple("FeatureConfig", ["vocab_size"])


# ----------------------------- Pallas kernel ------------------------------ #
def _feature_embedding_kernel(idx_ref, scale_ref, table_ref, out_ref, *,
                              tile_rows, group):
    # idx_ref:   SMEM (R_pad,)    int32   global row index into packed table
    # scale_ref: SMEM (R_pad,)    float32 1.0 (categorical) or x (continuous)
    # table_ref: VMEM (V, 1, E)   float32 fully resident packed table
    # out_ref:   VMEM (tile_rows, 1, group*E) float32 current row tile
    E = table_ref.shape[-1]
    base = pl.program_id(0) * (tile_rows * group)

    def body(r, carry):
        flat0 = base + r * group
        for g in range(group):                      # static unroll over lane groups
            i = idx_ref[flat0 + g]                  # SMEM scalar read (addressing)
            s = scale_ref[flat0 + g]                # SMEM scalar read
            # Gather one table row (dynamic leading-dim index) and scale on VPU.
            out_ref[r, :, g * E:(g + 1) * E] = table_ref[i] * s
        return carry

    lax.fori_loop(0, tile_rows, body, 0, unroll=min(tile_rows, 8))


# ------------------------------ Wrapper ----------------------------------- #
def feature_embedding_forward(X, size_list, tables, *, tile_rows=256):
    """X: (B, F) float32. tables[i]: (vocab_size_i, E) float32. Returns (B, F, E)."""
    B, F = X.shape
    E = tables[0].shape[1]

    # --- vectorized index / scale construction (no per-feature Python stacking)
    vocab = np.asarray([fc.vocab_size for fc in size_list], dtype=np.int32)
    offsets = np.zeros_like(vocab)
    offsets[1:] = np.cumsum(vocab)[:-1]
    is_cont = vocab == 1
    V = int(vocab.sum())

    Xf = X.astype(jnp.float32)
    off_c = jnp.asarray(offsets)[None, :]                       # (1, F) int32
    cont_c = jnp.asarray(is_cont)[None, :]                      # (1, F) bool
    # categorical: gidx = offset + int(x), scale = 1 ; continuous: gidx = offset, scale = x
    gidx = off_c + jnp.where(cont_c, 0.0, Xf).astype(jnp.int32)  # (B, F) int32
    scale = jnp.where(cont_c, Xf, 1.0).astype(jnp.float32)       # (B, F) float32

    # Packed table, (V, 1, E) so the gather indexes a leading (untiled) dim.
    table = jnp.concatenate(tables, axis=0).astype(jnp.float32).reshape(V, 1, E)
    # TODO(synk): for very large packed vocabularies the (V, 1, E) layout pads
    # each row to an (8,128) VMEM tile; switch to a dense (V, E) sublane-gather
    # or HBM paging if V*4KiB stops fitting VMEM.

    # --- lane-dense grouping: pack `group` consecutive (b,f) rows along lanes.
    R = B * F
    group = (128 // E) if (E <= 128 and 128 % E == 0) else 1
    GE = group * E
    RG = -(-R // group)                      # grouped rows
    tile_rows = max(1, min(tile_rows, RG))   # grouped rows per grid step
    RG_pad = -(-RG // tile_rows) * tile_rows
    R_pad = RG_pad * group

    pad = R_pad - R
    gidx_flat = jnp.pad(gidx.reshape(R).astype(jnp.int32), (0, pad))
    scale_flat = jnp.pad(scale.reshape(R), (0, pad))   # padded rows: scale=0 -> zeros

    grid = (RG_pad // tile_rows,)

    # VMEM budget (explicit, sized for v7x's smaller VMEM too).
    lane_e = -(-E // 128) * 128
    lane_ge = -(-GE // 128) * 128
    table_vmem = V * 8 * lane_e * 4
    out_block_vmem = tile_rows * 8 * lane_ge * 4
    vmem_limit = int(min(max(table_vmem + 2 * out_block_vmem + (4 << 20), 16 << 20),
                         64 << 20))

    cost = pl.CostEstimate(
        flops=2 * R_pad * E,                      # the scale multiplies
        transcendentals=0,
        bytes_accessed=R_pad * E * 4 + V * E * 4 + R_pad * 8,
    )

    kernel = functools.partial(_feature_embedding_kernel,
                               tile_rows=tile_rows, group=group)

    out3 = pl.pallas_call(
        kernel,
        out_shape=jax.ShapeDtypeStruct((RG_pad, 1, GE), jnp.float32),
        grid_spec=pltpu.PrefetchScalarGridSpec(
            num_scalar_prefetch=1,                # gidx -> SMEM (addressing data)
            grid=grid,
            in_specs=[
                pl.BlockSpec(memory_space=pltpu.MemorySpace.SMEM),   # scale (whole, SMEM)
                pl.BlockSpec(memory_space=pltpu.MemorySpace.VMEM),   # table (whole, resident)
            ],
            out_specs=pl.BlockSpec((tile_rows, 1, GE),
                                   lambda t, idx_ref: (t, 0, 0)),
        ),
        compiler_params=pltpu.CompilerParams(
            dimension_semantics=(pltpu.PARALLEL,),
            vmem_limit_bytes=vmem_limit,
        ),
        cost_estimate=cost,
    )(gidx_flat, scale_flat, table)

    return out3.reshape(R_pad, E)[:R].reshape(B, F, E)


# -------------------- Deterministic parameter init ------------------------ #
def init_tables(key, size_list, embedding_size):
    """Xavier-uniform with tanh gain (5/3), matching the module's init."""
    gain = 5.0 / 3.0
    tables = []
    for i, fc in enumerate(size_list):
        k = jax.random.fold_in(key, i)
        if fc.vocab_size > 1:
            fan_in, fan_out = embedding_size, fc.vocab_size
            bound = gain * np.sqrt(6.0 / (fan_in + fan_out))
            w = jax.random.uniform(
                k, (fc.vocab_size, embedding_size), jnp.float32, -bound, bound)
        else:
            fan_in, fan_out = 1, embedding_size
            bound = gain * np.sqrt(6.0 / (fan_in + fan_out))
            w = jax.random.uniform(
                k, (1, embedding_size), jnp.float32, -bound, bound)
        tables.append(w)
    return tables


# -------------------------- Pure-JAX reference ---------------------------- #
def feature_embedding_reference(X, size_list, tables):
    outs = []
    for i, fc in enumerate(size_list):
        if fc.vocab_size == 1:
            tar = X[:, i:i + 1].astype(jnp.float32)        # (B, 1)
            outs.append(tar @ tables[i])                   # (B, E)
        else:
            idx = X[:, i].astype(jnp.int32)
            outs.append(tables[i][idx])                    # (B, E)
    return jnp.stack(outs, axis=1)                         # (B, F, E)


if __name__ == "__main__":
    key = jax.random.PRNGKey(0)

    # Small deterministic config: 4 features (2 categorical, 2 continuous).
    size_list = [
        FeatureConfig(vocab_size=5),
        FeatureConfig(vocab_size=1),
        FeatureConfig(vocab_size=7),
        FeatureConfig(vocab_size=1),
    ]
    embedding_size = 32
    batch = 8

    k_tab, k_cat0, k_cat2, k_cont1, k_cont3 = jax.random.split(key, 5)
    tables = init_tables(k_tab, size_list, embedding_size)

    # X (B, F) float32: categorical columns hold integer-valued floats
    # (the PyTorch forward casts them with .long()).
    cat0 = jax.random.randint(k_cat0, (batch,), 0, 5).astype(jnp.float32)
    cont1 = jax.random.normal(k_cont1, (batch,), jnp.float32)
    cat2 = jax.random.randint(k_cat2, (batch,), 0, 7).astype(jnp.float32)
    cont3 = jax.random.normal(k_cont3, (batch,), jnp.float32)
    X = jnp.stack([cat0, cont1, cat2, cont3], axis=1)      # (8, 4)

    # tile_rows=4 -> grid of 2 steps, exercising the pipelined row tiling.
    out = feature_embedding_forward(X, size_list, tables, tile_rows=4)
    out = jax.block_until_ready(out)

    ref = feature_embedding_reference(X, size_list, tables)
    np.testing.assert_allclose(np.asarray(out), np.asarray(ref),
                               rtol=1e-5, atol=1e-5)
    assert out.shape == (batch, len(size_list), embedding_size)

    print("KERNEL_OK")
</pallas_src>

<mosaic_0001>
module attributes {stable_mosaic.version = 11 : i64} {
  func.func @_feature_embedding_kernel(%arg0: i32, %arg1: memref<32xi32, #tpu.memory_space<smem>>, %arg2: memref<32xf32, #tpu.memory_space<smem>>, %arg3: memref<14x1x32xf32, #tpu.memory_space<vmem>>, %arg4: memref<4x1x128xf32, #tpu.memory_space<vmem>>) attributes {dimension_semantics = [#tpu.dimension_semantics<parallel>], iteration_bounds = array<i64: 2>, scalar_prefetch = 1 : i64, scratch_operands = 0 : i64, tpu.core_type = #tpu.core_type<tc>, window_params = [{transform_indices = @transform_0, window_bounds = array<i64: 32>}, {pipeline_mode = #tpu.pipeline_mode<synchronous>, transform_indices = @transform_1, window_bounds = array<i64: 14, 1, 32>}, {transform_indices = @transform_2, window_bounds = array<i64: 4, 1, 128>}]} {
    %c16_i32 = arith.constant 16 : i32
    %0 = arith.muli %arg0, %c16_i32 : i32
    %c0_i32 = arith.constant 0 : i32
    %c4_i32 = arith.constant 4 : i32
    %1 = arith.muli %c0_i32, %c4_i32 : i32
    %2 = arith.addi %0, %1 : i32
    %c0_i32_0 = arith.constant 0 : i32
    %3 = arith.addi %2, %c0_i32_0 : i32
    %4 = arith.index_cast %3 : i32 to index
    %5 = memref.load %arg1[%4] : memref<32xi32, #tpu.memory_space<smem>>
    %c0_i32_1 = arith.constant 0 : i32
    %6 = arith.addi %2, %c0_i32_1 : i32
    %7 = arith.index_cast %6 : i32 to index
    %8 = memref.load %arg2[%7] : memref<32xf32, #tpu.memory_space<smem>>
    %9 = arith.index_cast %5 : i32 to index
    %c0 = arith.constant 0 : index
    %c0_2 = arith.constant 0 : index
    %10 = vector.load %arg3[%9, %c0, %c0_2] : memref<14x1x32xf32, #tpu.memory_space<vmem>>, vector<1x1x32xf32>
    %11 = vector.shape_cast %10 : vector<1x1x32xf32> to vector<1x32xf32>
    %12 = vector.broadcast %8 : f32 to vector<1x32xf32>
    %13 = arith.mulf %11, %12 : vector<1x32xf32>
    %14 = arith.index_cast %c0_i32 : i32 to index
    %c0_3 = arith.constant 0 : index
    %c0_4 = arith.constant 0 : index
    %15 = vector.load %arg4[%14, %c0_3, %c0_4] : memref<4x1x128xf32, #tpu.memory_space<vmem>>, vector<1x1x32xf32>
    %16 = vector.shape_cast %15 : vector<1x1x32xf32> to vector<1x32xf32>
    %17 = vector.shape_cast %13 : vector<1x32xf32> to vector<1x1x32xf32>
    tpu.vector_store %arg4[%14, %c0_3, %c0_4], %17 {strides = array<i32>} : memref<4x1x128xf32, #tpu.memory_space<vmem>>, vector<1x1x32xf32>,
    %c1_i32 = arith.constant 1 : i32
    %18 = arith.addi %2, %c1_i32 : i32
    %19 = arith.index_cast %18 : i32 to index
    %20 = memref.load %arg1[%19] : memref<32xi32, #tpu.memory_space<smem>>
    %c1_i32_5 = arith.constant 1 : i32
    %21 = arith.addi %2, %c1_i32_5 : i32
    %22 = arith.index_cast %21 : i32 to index
    %23 = memref.load %arg2[%22] : memref<32xf32, #tpu.memory_space<smem>>
    %24 = arith.index_cast %20 : i32 to index
    %c0_6 = arith.constant 0 : index
    %c0_7 = arith.constant 0 : index
    %25 = vector.load %arg3[%24, %c0_6, %c0_7] : memref<14x1x32xf32, #tpu.memory_space<vmem>>, vector<1x1x32xf32>
    %26 = vector.shape_cast %25 : vector<1x1x32xf32> to vector<1x32xf32>
    %27 = vector.broadcast %23 : f32 to vector<1x32xf32>
    %28 = arith.mulf %26, %27 : vector<1x32xf32>
    %29 = arith.index_cast %c0_i32 : i32 to index
    %c0_8 = arith.constant 0 : index
    %c32 = arith.constant 32 : index
    %30 = vector.load %arg4[%29, %c0_8, %c32] : memref<4x1x128xf32, #tpu.memory_space<vmem>>, vector<1x1x32xf32>
    %31 = vector.shape_cast %30 : vector<1x1x32xf32> to vector<1x32xf32>
    %32 = vector.shape_cast %28 : vector<1x32xf32> to vector<1x1x32xf32>
    tpu.vector_store %arg4[%29, %c0_8, %c32], %32 {strides = array<i32>} : memref<4x1x128xf32, #tpu.memory_space<vmem>>, vector<1x1x32xf32>,
    %c2_i32 = arith.constant 2 : i32
    %33 = arith.addi %2, %c2_i32 : i32
    %34 = arith.index_cast %33 : i32 to index
    %35 = memref.load %arg1[%34] : memref<32xi32, #tpu.memory_space<smem>>
    %c2_i32_9 = arith.constant 2 : i32
    %36 = arith.addi %2, %c2_i32_9 : i32
    %37 = arith.index_cast %36 : i32 to index
    %38 = memref.load %arg2[%37] : memref<32xf32, #tpu.memory_space<smem>>
    %39 = arith.index_cast %35 : i32 to index
    %c0_10 = arith.constant 0 : index
    %c0_11 = arith.constant 0 : index
    %40 = vector.load %arg3[%39, %c0_10, %c0_11] : memref<14x1x32xf32, #tpu.memory_space<vmem>>, vector<1x1x32xf32>
    %41 = vector.shape_cast %40 : vector<1x1x32xf32> to vector<1x32xf32>
    %42 = vector.broadcast %38 : f32 to vector<1x32xf32>
    %43 = arith.mulf %41, %42 : vector<1x32xf32>
    %44 = arith.index_cast %c0_i32 : i32 to index
    %c0_12 = arith.constant 0 : index
    %c64 = arith.constant 64 : index
    %45 = vector.load %arg4[%44, %c0_12, %c64] : memref<4x1x128xf32, #tpu.memory_space<vmem>>, vector<1x1x32xf32>
    %46 = vector.shape_cast %45 : vector<1x1x32xf32> to vector<1x32xf32>
    %47 = vector.shape_cast %43 : vector<1x32xf32> to vector<1x1x32xf32>
    tpu.vector_store %arg4[%44, %c0_12, %c64], %47 {strides = array<i32>} : memref<4x1x128xf32, #tpu.memory_space<vmem>>, vector<1x1x32xf32>,
    %c3_i32 = arith.constant 3 : i32
    %48 = arith.addi %2, %c3_i32 : i32
    %49 = arith.index_cast %48 : i32 to index
    %50 = memref.load %arg1[%49] : memref<32xi32, #tpu.memory_space<smem>>
    %c3_i32_13 = arith.constant 3 : i32
    %51 = arith.addi %2, %c3_i32_13 : i32
    %52 = arith.index_cast %51 : i32 to index
    %53 = memref.load %arg2[%52] : memref<32xf32, #tpu.memory_space<smem>>
    %54 = arith.index_cast %50 : i32 to index
    %c0_14 = arith.constant 0 : index
    %c0_15 = arith.constant 0 : index
    %55 = vector.load %arg3[%54, %c0_14, %c0_15] : memref<14x1x32xf32, #tpu.memory_space<vmem>>, vector<1x1x32xf32>
    %56 = vector.shape_cast %55 : vector<1x1x32xf32> to vector<1x32xf32>
    %57 = vector.broadcast %53 : f32 to vector<1x32xf32>
    %58 = arith.mulf %56, %57 : vector<1x32xf32>
    %59 = arith.index_cast %c0_i32 : i32 to index
    %c0_16 = arith.constant 0 : index
    %c96 = arith.constant 96 : index
    %60 = vector.load %arg4[%59, %c0_16, %c96] : memref<4x1x128xf32, #tpu.memory_space<vmem>>, vector<1x1x32xf32>
    %61 = vector.shape_cast %60 : vector<1x1x32xf32> to vector<1x32xf32>
    %62 = vector.shape_cast %58 : vector<1x32xf32> to vector<1x1x32xf32>
    tpu.vector_store %arg4[%59, %c0_16, %c96], %62 {strides = array<i32>} : memref<4x1x128xf32, #tpu.memory_space<vmem>>, vector<1x1x32xf32>,
    %c1_i32_17 = arith.constant 1 : i32
    %c4_i32_18 = arith.constant 4 : i32
    %63 = arith.muli %c1_i32_17, %c4_i32_18 : i32
    %64 = arith.addi %0, %63 : i32
    %c0_i32_19 = arith.constant 0 : i32
    %65 = arith.addi %64, %c0_i32_19 : i32
    %66 = arith.index_cast %65 : i32 to index
    %67 = memref.load %arg1[%66] : memref<32xi32, #tpu.memory_space<smem>>
    %c0_i32_20 = arith.constant 0 : i32
    %68 = arith.addi %64, %c0_i32_20 : i32
    %69 = arith.index_cast %68 : i32 to index
    %70 = memref.load %arg2[%69] : memref<32xf32, #tpu.memory_space<smem>>
    %71 = arith.index_cast %67 : i32 to index
    %c0_21 = arith.constant 0 : index
    %c0_22 = arith.constant 0 : index
    %72 = vector.load %arg3[%71, %c0_21, %c0_22] : memref<14x1x32xf32, #tpu.memory_space<vmem>>, vector<1x1x32xf32>
    %73 = vector.shape_cast %72 : vector<1x1x32xf32> to vector<1x32xf32>
    %74 = vector.broadcast %70 : f32 to vector<1x32xf32>
    %75 = arith.mulf %73, %74 : vector<1x32xf32>
    %76 = arith.index_cast %c1_i32_17 : i32 to index
    %c0_23 = arith.constant 0 : index
    %c0_24 = arith.constant 0 : index
    %77 = vector.load %arg4[%76, %c0_23, %c0_24] : memref<4x1x128xf32, #tpu.memory_space<vmem>>, vector<1x1x32xf32>
    %78 = vector.shape_cast %77 : vector<1x1x32xf32> to vector<1x32xf32>
    %79 = vector.shape_cast %75 : vector<1x32xf32> to vector<1x1x32xf32>
    tpu.vector_store %arg4[%76, %c0_23, %c0_24], %79 {strides = array<i32>} : memref<4x1x128xf32, #tpu.memory_space<vmem>>, vector<1x1x32xf32>,
    %c1_i32_25 = arith.constant 1 : i32
    %80 = arith.addi %64, %c1_i32_25 : i32
    %81 = arith.index_cast %80 : i32 to index
    %82 = memref.load %arg1[%81] : memref<32xi32, #tpu.memory_space<smem>>
    %c1_i32_26 = arith.constant 1 : i32
    %83 = arith.addi %64, %c1_i32_26 : i32
    %84 = arith.index_cast %83 : i32 to index
    %85 = memref.load %arg2[%84] : memref<32xf32, #tpu.memory_space<smem>>
    %86 = arith.index_cast %82 : i32 to index
    %c0_27 = arith.constant 0 : index
    %c0_28 = arith.constant 0 : index
    %87 = vector.load %arg3[%86, %c0_27, %c0_28] : memref<14x1x32xf32, #tpu.memory_space<vmem>>, vector<1x1x32xf32>
    %88 = vector.shape_cast %87 : vector<1x1x32xf32> to vector<1x32xf32>
    %89 = vector.broadcast %85 : f32 to vector<1x32xf32>
    %90 = arith.mulf %88, %89 : vector<1x32xf32>
    %91 = arith.index_cast %c1_i32_17 : i32 to index
    %c0_29 = arith.constant 0 : index
    %c32_30 = arith.constant 32 : index
    %92 = vector.load %arg4[%91, %c0_29, %c32_30] : memref<4x1x128xf32, #tpu.memory_space<vmem>>, vector<1x1x32xf32>
    %93 = vector.shape_cast %92 : vector<1x1x32xf32> to vector<1x32xf32>
    %94 = vector.shape_cast %90 : vector<1x32xf32> to vector<1x1x32xf32>
    tpu.vector_store %arg4[%91, %c0_29, %c32_30], %94 {strides = array<i32>} : memref<4x1x128xf32, #tpu.memory_space<vmem>>, vector<1x1x32xf32>,
    %c2_i32_31 = arith.constant 2 : i32
    %95 = arith.addi %64, %c2_i32_31 : i32
    %96 = arith.index_cast %95 : i32 to index
    %97 = memref.load %arg1[%96] : memref<32xi32, #tpu.memory_space<smem>>
    %c2_i32_32 = arith.constant 2 : i32
    %98 = arith.addi %64, %c2_i32_32 : i32
    %99 = arith.index_cast %98 : i32 to index
    %100 = memref.load %arg2[%99] : memref<32xf32, #tpu.memory_space<smem>>
    %101 = arith.index_cast %97 : i32 to index
    %c0_33 = arith.constant 0 : index
    %c0_34 = arith.constant 0 : index
    %102 = vector.load %arg3[%101, %c0_33, %c0_34] : memref<14x1x32xf32, #tpu.memory_space<vmem>>, vector<1x1x32xf32>
    %103 = vector.shape_cast %102 : vector<1x1x32xf32> to vector<1x32xf32>
    %104 = vector.broadcast %100 : f32 to vector<1x32xf32>
    %105 = arith.mulf %103, %104 : vector<1x32xf32>
    %106 = arith.index_cast %c1_i32_17 : i32 to index
    %c0_35 = arith.constant 0 : index
    %c64_36 = arith.constant 64 : index
    %107 = vector.load %arg4[%106, %c0_35, %c64_36] : memref<4x1x128xf32, #tpu.memory_space<vmem>>, vector<1x1x32xf32>
    %108 = vector.shape_cast %107 : vector<1x1x32xf32> to vector<1x32xf32>
    %109 = vector.shape_cast %105 : vector<1x32xf32> to vector<1x1x32xf32>
    tpu.vector_store %arg4[%106, %c0_35, %c64_36], %109 {strides = array<i32>} : memref<4x1x128xf32, #tpu.memory_space<vmem>>, vector<1x1x32xf32>,
    %c3_i32_37 = arith.constant 3 : i32
    %110 = arith.addi %64, %c3_i32_37 : i32
    %111 = arith.index_cast %110 : i32 to index
    %112 = memref.load %arg1[%111] : memref<32xi32, #tpu.memory_space<smem>>
    %c3_i32_38 = arith.constant 3 : i32
    %113 = arith.addi %64, %c3_i32_38 : i32
    %114 = arith.index_cast %113 : i32 to index
    %115 = memref.load %arg2[%114] : memref<32xf32, #tpu.memory_space<smem>>
    %116 = arith.index_cast %112 : i32 to index
    %c0_39 = arith.constant 0 : index
    %c0_40 = arith.constant 0 : index
    %117 = vector.load %arg3[%116, %c0_39, %c0_40] : memref<14x1x32xf32, #tpu.memory_space<vmem>>, vector<1x1x32xf32>
    %118 = vector.shape_cast %117 : vector<1x1x32xf32> to vector<1x32xf32>
    %119 = vector.broadcast %115 : f32 to vector<1x32xf32>
    %120 = arith.mulf %118, %119 : vector<1x32xf32>
    %121 = arith.index_cast %c1_i32_17 : i32 to index
    %c0_41 = arith.constant 0 : index
    %c96_42 = arith.constant 96 : index
    %122 = vector.load %arg4[%121, %c0_41, %c96_42] : memref<4x1x128xf32, #tpu.memory_space<vmem>>, vector<1x1x32xf32>
    %123 = vector.shape_cast %122 : vector<1x1x32xf32> to vector<1x32xf32>
    %124 = vector.shape_cast %120 : vector<1x32xf32> to vector<1x1x32xf32>
    tpu.vector_store %arg4[%121, %c0_41, %c96_42], %124 {strides = array<i32>} : memref<4x1x128xf32, #tpu.memory_space<vmem>>, vector<1x1x32xf32>,
    %c2_i32_43 = arith.constant 2 : i32
    %c4_i32_44 = arith.constant 4 : i32
    %125 = arith.muli %c2_i32_43, %c4_i32_44 : i32
    %126 = arith.addi %0, %125 : i32
    %c0_i32_45 = arith.constant 0 : i32
    %127 = arith.addi %126, %c0_i32_45 : i32
    %128 = arith.index_cast %127 : i32 to index
    %129 = memref.load %arg1[%128] : memref<32xi32, #tpu.memory_space<smem>>
    %c0_i32_46 = arith.constant 0 : i32
    %130 = arith.addi %126, %c0_i32_46 : i32
    %131 = arith.index_cast %130 : i32 to index
    %132 = memref.load %arg2[%131] : memref<32xf32, #tpu.memory_space<smem>>
    %133 = arith.index_cast %129 : i32 to index
    %c0_47 = arith.constant 0 : index
    %c0_48 = arith.constant 0 : index
    %134 = vector.load %arg3[%133, %c0_47, %c0_48] : memref<14x1x32xf32, #tpu.memory_space<vmem>>, vector<1x1x32xf32>
    %135 = vector.shape_cast %134 : vector<1x1x32xf32> to vector<1x32xf32>
    %136 = vector.broadcast %132 : f32 to vector<1x32xf32>
    %137 = arith.mulf %135, %136 : vector<1x32xf32>
    %138 = arith.index_cast %c2_i32_43 : i32 to index
    %c0_49 = arith.constant 0 : index
    %c0_50 = arith.constant 0 : index
    %139 = vector.load %arg4[%138, %c0_49, %c0_50] : memref<4x1x128xf32, #tpu.memory_space<vmem>>, vector<1x1x32xf32>
    %140 = vector.shape_cast %139 : vector<1x1x32xf32> to vector<1x32xf32>
    %141 = vector.shape_cast %137 : vector<1x32xf32> to vector<1x1x32xf32>
    tpu.vector_store %arg4[%138, %c0_49, %c0_50], %141 {strides = array<i32>} : memref<4x1x128xf32, #tpu.memory_space<vmem>>, vector<1x1x32xf32>,
    %c1_i32_51 = arith.constant 1 : i32
    %142 = arith.addi %126, %c1_i32_51 : i32
    %143 = arith.index_cast %142 : i32 to index
    %144 = memref.load %arg1[%143] : memref<32xi32, #tpu.memory_space<smem>>
    %c1_i32_52 = arith.constant 1 : i32
    %145 = arith.addi %126, %c1_i32_52 : i32
    %146 = arith.index_cast %145 : i32 to index
    %147 = memref.load %arg2[%146] : memref<32xf32, #tpu.memory_space<smem>>
    %148 = arith.index_cast %144 : i32 to index
    %c0_53 = arith.constant 0 : index
    %c0_54 = arith.constant 0 : index
    %149 = vector.load %arg3[%148, %c0_53, %c0_54] : memref<14x1x32xf32, #tpu.memory_space<vmem>>, vector<1x1x32xf32>
    %150 = vector.shape_cast %149 : vector<1x1x32xf32> to vector<1x32xf32>
    %151 = vector.broadcast %147 : f32 to vector<1x32xf32>
    %152 = arith.mulf %150, %151 : vector<1x32xf32>
    %153 = arith.index_cast %c2_i32_43 : i32 to index
    %c0_55 = arith.constant 0 : index
    %c32_56 = arith.constant 32 : index
    %154 = vector.load %arg4[%153, %c0_55, %c32_56] : memref<4x1x128xf32, #tpu.memory_space<vmem>>, vector<1x1x32xf32>
    %155 = vector.shape_cast %154 : vector<1x1x32xf32> to vector<1x32xf32>
    %156 = vector.shape_cast %152 : vector<1x32xf32> to vector<1x1x32xf32>
    tpu.vector_store %arg4[%153, %c0_55, %c32_56], %156 {strides = array<i32>} : memref<4x1x128xf32, #tpu.memory_space<vmem>>, vector<1x1x32xf32>,
    %c2_i32_57 = arith.constant 2 : i32
    %157 = arith.addi %126, %c2_i32_57 : i32
    %158 = arith.index_cast %157 : i32 to index
    %159 = memref.load %arg1[%158] : memref<32xi32, #tpu.memory_space<smem>>
    %c2_i32_58 = arith.constant 2 : i32
    %160 = arith.addi %126, %c2_i32_58 : i32
    %161 = arith.index_cast %160 : i32 to index
    %162 = memref.load %arg2[%161] : memref<32xf32, #tpu.memory_space<smem>>
    %163 = arith.index_cast %159 : i32 to index
    %c0_59 = arith.constant 0 : index
    %c0_60 = arith.constant 0 : index
    %164 = vector.load %arg3[%163, %c0_59, %c0_60] : memref<14x1x32xf32, #tpu.memory_space<vmem>>, vector<1x1x32xf32>
    %165 = vector.shape_cast %164 : vector<1x1x32xf32> to vector<1x32xf32>
    %166 = vector.broadcast %162 : f32 to vector<1x32xf32>
    %167 = arith.mulf %165, %166 : vector<1x32xf32>
    %168 = arith.index_cast %c2_i32_43 : i32 to index
    %c0_61 = arith.constant 0 : index
    %c64_62 = arith.constant 64 : index
    %169 = vector.load %arg4[%168, %c0_61, %c64_62] : memref<4x1x128xf32, #tpu.memory_space<vmem>>, vector<1x1x32xf32>
    %170 = vector.shape_cast %169 : vector<1x1x32xf32> to vector<1x32xf32>
    %171 = vector.shape_cast %167 : vector<1x32xf32> to vector<1x1x32xf32>
    tpu.vector_store %arg4[%168, %c0_61, %c64_62], %171 {strides = array<i32>} : memref<4x1x128xf32, #tpu.memory_space<vmem>>, vector<1x1x32xf32>,
    %c3_i32_63 = arith.constant 3 : i32
    %172 = arith.addi %126, %c3_i32_63 : i32
    %173 = arith.index_cast %172 : i32 to index
    %174 = memref.load %arg1[%173] : memref<32xi32, #tpu.memory_space<smem>>
    %c3_i32_64 = arith.constant 3 : i32
    %175 = arith.addi %126, %c3_i32_64 : i32
    %176 = arith.index_cast %175 : i32 to index
    %177 = memref.load %arg2[%176] : memref<32xf32, #tpu.memory_space<smem>>
    %178 = arith.index_cast %174 : i32 to index
    %c0_65 = arith.constant 0 : index
    %c0_66 = arith.constant 0 : index
    %179 = vector.load %arg3[%178, %c0_65, %c0_66] : memref<14x1x32xf32, #tpu.memory_space<vmem>>, vector<1x1x32xf32>
    %180 = vector.shape_cast %179 : vector<1x1x32xf32> to vector<1x32xf32>
    %181 = vector.broadcast %177 : f32 to vector<1x32xf32>
    %182 = arith.mulf %180, %181 : vector<1x32xf32>
    %183 = arith.index_cast %c2_i32_43 : i32 to index
    %c0_67 = arith.constant 0 : index
    %c96_68 = arith.constant 96 : index
    %184 = vector.load %arg4[%183, %c0_67, %c96_68] : memref<4x1x128xf32, #tpu.memory_space<vmem>>, vector<1x1x32xf32>
    %185 = vector.shape_cast %184 : vector<1x1x32xf32> to vector<1x32xf32>
    %186 = vector.shape_cast %182 : vector<1x32xf32> to vector<1x1x32xf32>
    tpu.vector_store %arg4[%183, %c0_67, %c96_68], %186 {strides = array<i32>} : memref<4x1x128xf32, #tpu.memory_space<vmem>>, vector<1x1x32xf32>,
    %c3_i32_69 = arith.constant 3 : i32
    %c4_i32_70 = arith.constant 4 : i32
    %187 = arith.muli %c3_i32_69, %c4_i32_70 : i32
    %188 = arith.addi %0, %187 : i32
    %c0_i32_71 = arith.constant 0 : i32
    %189 = arith.addi %188, %c0_i32_71 : i32
    %190 = arith.index_cast %189 : i32 to index
    %191 = memref.load %arg1[%190] : memref<32xi32, #tpu.memory_space<smem>>
    %c0_i32_72 = arith.constant 0 : i32
    %192 = arith.addi %188, %c0_i32_72 : i32
    %193 = arith.index_cast %192 : i32 to index
    %194 = memref.load %arg2[%193] : memref<32xf32, #tpu.memory_space<smem>>
    %195 = arith.index_cast %191 : i32 to index
    %c0_73 = arith.constant 0 : index
    %c0_74 = arith.constant 0 : index
    %196 = vector.load %arg3[%195, %c0_73, %c0_74] : memref<14x1x32xf32, #tpu.memory_space<vmem>>, vector<1x1x32xf32>
    %197 = vector.shape_cast %196 : vector<1x1x32xf32> to vector<1x32xf32>
    %198 = vector.broadcast %194 : f32 to vector<1x32xf32>
    %199 = arith.mulf %197, %198 : vector<1x32xf32>
    %200 = arith.index_cast %c3_i32_69 : i32 to index
    %c0_75 = arith.constant 0 : index
    %c0_76 = arith.constant 0 : index
    %201 = vector.load %arg4[%200, %c0_75, %c0_76] : memref<4x1x128xf32, #tpu.memory_space<vmem>>, vector<1x1x32xf32>
    %202 = vector.shape_cast %201 : vector<1x1x32xf32> to vector<1x32xf32>
    %203 = vector.shape_cast %199 : vector<1x32xf32> to vector<1x1x32xf32>
    tpu.vector_store %arg4[%200, %c0_75, %c0_76], %203 {strides = array<i32>} : memref<4x1x128xf32, #tpu.memory_space<vmem>>, vector<1x1x32xf32>,
    %c1_i32_77 = arith.constant 1 : i32
    %204 = arith.addi %188, %c1_i32_77 : i32
    %205 = arith.index_cast %204 : i32 to index
    %206 = memref.load %arg1[%205] : memref<32xi32, #tpu.memory_space<smem>>
    %c1_i32_78 = arith.constant 1 : i32
    %207 = arith.addi %188, %c1_i32_78 : i32
    %208 = arith.index_cast %207 : i32 to index
    %209 = memref.load %arg2[%208] : memref<32xf32, #tpu.memory_space<smem>>
    %210 = arith.index_cast %206 : i32 to index
    %c0_79 = arith.constant 0 : index
    %c0_80 = arith.constant 0 : index
    %211 = vector.load %arg3[%210, %c0_79, %c0_80] : memref<14x1x32xf32, #tpu.memory_space<vmem>>, vector<1x1x32xf32>
    %212 = vector.shape_cast %211 : vector<1x1x32xf32> to vector<1x32xf32>
    %213 = vector.broadcast %209 : f32 to vector<1x32xf32>
    %214 = arith.mulf %212, %213 : vector<1x32xf32>
    %215 = arith.index_cast %c3_i32_69 : i32 to index
    %c0_81 = arith.constant 0 : index
    %c32_82 = arith.constant 32 : index
    %216 = vector.load %arg4[%215, %c0_81, %c32_82] : memref<4x1x128xf32, #tpu.memory_space<vmem>>, vector<1x1x32xf32>
    %217 = vector.shape_cast %216 : vector<1x1x32xf32> to vector<1x32xf32>
    %218 = vector.shape_cast %214 : vector<1x32xf32> to vector<1x1x32xf32>
    tpu.vector_store %arg4[%215, %c0_81, %c32_82], %218 {strides = array<i32>} : memref<4x1x128xf32, #tpu.memory_space<vmem>>, vector<1x1x32xf32>,
    %c2_i32_83 = arith.constant 2 : i32
    %219 = arith.addi %188, %c2_i32_83 : i32
    %220 = arith.index_cast %219 : i32 to index
    %221 = memref.load %arg1[%220] : memref<32xi32, #tpu.memory_space<smem>>
    %c2_i32_84 = arith.constant 2 : i32
    %222 = arith.addi %188, %c2_i32_84 : i32
    %223 = arith.index_cast %222 : i32 to index
    %224 = memref.load %arg2[%223] : memref<32xf32, #tpu.memory_space<smem>>
    %225 = arith.index_cast %221 : i32 to index
    %c0_85 = arith.constant 0 : index
    %c0_86 = arith.constant 0 : index
    %226 = vector.load %arg3[%225, %c0_85, %c0_86] : memref<14x1x32xf32, #tpu.memory_space<vmem>>, vector<1x1x32xf32>
    %227 = vector.shape_cast %226 : vector<1x1x32xf32> to vector<1x32xf32>
    %228 = vector.broadcast %224 : f32 to vector<1x32xf32>
    %229 = arith.mulf %227, %228 : vector<1x32xf32>
    %230 = arith.index_cast %c3_i32_69 : i32 to index
    %c0_87 = arith.constant 0 : index
    %c64_88 = arith.constant 64 : index
    %231 = vector.load %arg4[%230, %c0_87, %c64_88] : memref<4x1x128xf32, #tpu.memory_space<vmem>>, vector<1x1x32xf32>
    %232 = vector.shape_cast %231 : vector<1x1x32xf32> to vector<1x32xf32>
    %233 = vector.shape_cast %229 : vector<1x32xf32> to vector<1x1x32xf32>
    tpu.vector_store %arg4[%230, %c0_87, %c64_88], %233 {strides = array<i32>} : memref<4x1x128xf32, #tpu.memory_space<vmem>>, vector<1x1x32xf32>,
    %c3_i32_89 = arith.constant 3 : i32
    %234 = arith.addi %188, %c3_i32_89 : i32
    %235 = arith.index_cast %234 : i32 to index
    %236 = memref.load %arg1[%235] : memref<32xi32, #tpu.memory_space<smem>>
    %c3_i32_90 = arith.constant 3 : i32
    %237 = arith.addi %188, %c3_i32_90 : i32
    %238 = arith.index_cast %237 : i32 to index
    %239 = memref.load %arg2[%238] : memref<32xf32, #tpu.memory_space<smem>>
    %240 = arith.index_cast %236 : i32 to index
    %c0_91 = arith.constant 0 : index
    %c0_92 = arith.constant 0 : index
    %241 = vector.load %arg3[%240, %c0_91, %c0_92] : memref<14x1x32xf32, #tpu.memory_space<vmem>>, vector<1x1x32xf32>
    %242 = vector.shape_cast %241 : vector<1x1x32xf32> to vector<1x32xf32>
    %243 = vector.broadcast %239 : f32 to vector<1x32xf32>
    %244 = arith.mulf %242, %243 : vector<1x32xf32>
    %245 = arith.index_cast %c3_i32_69 : i32 to index
    %c0_93 = arith.constant 0 : index
    %c96_94 = arith.constant 96 : index
    %246 = vector.load %arg4[%245, %c0_93, %c96_94] : memref<4x1x128xf32, #tpu.memory_space<vmem>>, vector<1x1x32xf32>
    %247 = vector.shape_cast %246 : vector<1x1x32xf32> to vector<1x32xf32>
    %248 = vector.shape_cast %244 : vector<1x32xf32> to vector<1x1x32xf32>
    tpu.vector_store %arg4[%245, %c0_93, %c96_94], %248 {strides = array<i32>} : memref<4x1x128xf32, #tpu.memory_space<vmem>>, vector<1x1x32xf32>,
    %c4_i32_95 = arith.constant 4 : i32
    return
  }
  func.func @transform_0(%arg0: i32, %arg1: memref<32xi32, #tpu.memory_space<smem>>) -> i32 {
    %c0_i32 = arith.constant 0 : i32
    %c0_i32_0 = arith.constant 0 : i32
    return %c0_i32 : i32
  }
  func.func @transform_1(%arg0: i32, %arg1: memref<32xi32, #tpu.memory_space<smem>>) -> (i32, i32, i32) {
    %c0_i32 = arith.constant 0 : i32
    %c0_i32_0 = arith.constant 0 : i32
    %c0_i32_1 = arith.constant 0 : i32
    %c0_i32_2 = arith.constant 0 : i32
    return %c0_i32, %c0_i32_0, %c0_i32_1 : i32, i32, i32
  }
  func.func @transform_2(%arg0: i32, %arg1: memref<32xi32, #tpu.memory_space<smem>>) -> (i32, i32, i32) {
    %c0_i32 = arith.constant 0 : i32
    %c0_i32_0 = arith.constant 0 : i32
    %c0_i32_1 = arith.constant 0 : i32
    return %arg0, %c0_i32, %c0_i32_0 : i32, i32, i32
  }
}

</mosaic_0001>

<llo_original>
// kernel: tpu_custom_call.1
$region0: #{tpu_custom_call.1}
  #allocation0 [shape = 'u32[]', space=smem, size = 0x4, offset = 0x4, fixed_abs, tag = 'smem constant byte address 0x4 - core index']
  #allocation1 [shape = 'u32[144,128]{1,0:T(1,128)}', space=vmem, size = 0x12000, scoped, tag = 'internal scratch']
  #allocation2 [shape = 's32[1]{0}', space=sflag, size = 0x4, scoped, tag = 'scoped memory for tpu_custom_call.1']
  #allocation3 [shape = 'u8[512]{0}', space=smem, size = 0x200, scoped, tag = 'prefetched SMEM operand 0']
  %s0 = inlined_call_operand.hbm [shape: s32[32], index: 0, kind: input, shape index: {}]
  %s1 = inlined_call_operand.vmem [shape: f32[32], index: 1, kind: input, shape index: {}]
  %s2 = inlined_call_operand.hbm [shape: f32[14,1,32], index: 2, kind: input, shape index: {}]
  %s3 = inlined_call_operand.hbm [shape: f32[8,1,128], index: 3, kind: output, shape index: {}]
  %s4 = sld [smem:[#allocation0]]
  $region49: #{tpu_custom_call.1} parent=0
    _
  %s6 = ssub.s32 1, %s4
  %s7 = scalar_select 0, %s6, %s4
  %9 = dma.hbm_to_smem %s0, 16, [#allocation3], [#allocation2]
  %10 = dma.done [#allocation2], 16
  %11 = sfence
  $region1: #{tpu_custom_call.1} parent=0
    #allocation4 [shape = 'u8[512]{0}', space=smem, size = 0x200, scoped, tag = 'input window, operand 1, single buffered']
    #allocation5 [shape = 's32[2]{0}', space=sflag, size = 0x8, scoped, tag = 'scoped memory for tpu_custom_call.1']
    #allocation6 [shape = 's32[2]{0}', space=sflag, size = 0x8, scoped, tag = 'scoped memory for tpu_custom_call.1']
    #allocation7 [shape = 's32[2]{0}', space=sflag, size = 0x8, scoped, tag = 'scoped memory for tpu_custom_call.1']
    #allocation8 [shape = 'u8[7168]{0}', space=vmem, size = 0x1c00, scoped, tag = 'input window, operand 2, single buffered']
    #allocation9 [shape = 'u8[4096]{0}', space=vmem, size = 0x1000, scoped, tag = 'output window, operand 0']
    %12 = vsyncpa [#allocation7], 0
    %13 = vsyncpa [#allocation5], 0
    %14 = vsyncpa [#allocation6], 0
    %s15 = scalar_lea.sflag [#allocation6], 1
    %16 = vsyncpa %s15, 0
    loop: start=0, step=1, limit=4
    $region2: #{tpu_custom_call.1} parent=1 // loop_pre_header
      _
    $region3: #{tpu_custom_call.1} parent=1 // loop_header
      %s18 = sphi 0, %s22
      %p19 = scmp.ge.s32.totalorder %s18, 4
      %s26 = sphi 0, %s26
      %s28 = sphi 0, %s26
      %s29 = sphi 0, %s28
      %s43 = sphi 0, %s29
      %s47 = sphi 0, %s47
      %s49 = sphi 0, %s47
      %s50 = sphi 0, %s49
      %s64 = sphi 0, %s50
      %s70 = sphi 0, %s72
      %s73 = sphi 0, %s70
      %s74 = sphi 0, %s73
      %s90 = sphi 0, %s74
    $region4: #{tpu_custom_call.1} parent=1 // loop_header_branch
      %21 = sbr.rel (%p19) target = $region8
    $region5: #{tpu_custom_call.1} parent=1 // loop_body
      %s23 = ssub.s32 %s18, 1
      %s24 = ssub.s32 %s18, 2
      %s25 = sadd.s32 %s18, 1
      %s27 = sadd.s32 %s26, 1
      %p30 = scmp.eq.s32.totalorder %s18, 1
      %p31 = scmp.ne.s32.totalorder %s26, %s28
      %p32 = scmp.eq.s32.totalorder %s18, 0
      %p33 = por %p31, %p32
      %p34 = scmp.ne.s32.totalorder %s26, %s28
      %p35 = scmp.eq.s32.totalorder %s23, 1
      %p36 = por %p34, %p35
      %p37 = scmp.ne.s32.totalorder %s28, %s29
      %p38 = scmp.eq.s32.totalorder %s23, 0
      %p39 = por %p37, %p38
      %p40 = scmp.ne.s32.totalorder %s28, %s29
      %p41 = scmp.eq.s32.totalorder %s24, 1
      %p42 = por %p40, %p41
      %p44 = scmp.ne.s32.totalorder %s29, %s43
      %p45 = scmp.eq.s32.totalorder %s24, 0
      %p46 = por %p44, %p45
      %s48 = sadd.s32 %s47, 1
      %p51 = scmp.eq.s32.totalorder %s18, 1
      %p52 = scmp.ne.s32.totalorder %s47, %s49
      %p53 = scmp.eq.s32.totalorder %s18, 0
      %p54 = por %p52, %p53
      %p55 = scmp.ne.s32.totalorder %s47, %s49
      %p56 = scmp.eq.s32.totalorder %s23, 1
      %p57 = por %p55, %p56
      %p58 = scmp.ne.s32.totalorder %s49, %s50
      %p59 = scmp.eq.s32.totalorder %s23, 0
      %p60 = por %p58, %p59
      %p61 = scmp.ne.s32.totalorder %s49, %s50
      %p62 = scmp.eq.s32.totalorder %s24, 1
      %p63 = por %p61, %p62
      %p65 = scmp.ne.s32.totalorder %s50, %s64
      %p66 = scmp.eq.s32.totalorder %s24, 0
      %p67 = por %p65, %p66
      %s68 = ssub.s32 %s18, %s25
      %p69 = scmp.eq.s32.totalorder %s68, 0
      %s71 = sadd.s32 %s70, 1
      %s72 = scalar_select %p69, %s70, %s71
      %p75 = pneg %p69
      %p76 = scmp.eq.s32.totalorder %s18, 1
      %p77 = por %p75, %p76
      %p78 = scmp.ne.s32.totalorder %s70, %s73
      %p79 = scmp.eq.s32.totalorder %s18, 0
      %p80 = por %p78, %p79
      %p81 = scmp.ne.s32.totalorder %s70, %s73
      %p82 = scmp.eq.s32.totalorder %s23, 1
      %p83 = por %p81, %p82
      %p84 = scmp.ne.s32.totalorder %s73, %s74
      %p85 = scmp.eq.s32.totalorder %s23, 0
      %p86 = por %p84, %p85
      %p87 = scmp.ne.s32.totalorder %s73, %s74
      %p88 = scmp.eq.s32.totalorder %s24, 1
      %p89 = por %p87, %p88
      %p91 = scmp.ne.s32.totalorder %s74, %s90
      %p92 = scmp.eq.s32.totalorder %s24, 0
      %p93 = por %p91, %p92
      %p94 = scmp.le.s32.totalorder 1, %s18
      %p95 = scmp.lt.s32.totalorder %s18, 3
      %p96 = pnand %p94, %p95
      %p97 = pneg %p96
      // Predicated region
      $region9: #{tpu_custom_call.1} parent=5 // pred_check
        _
      $region10: #{tpu_custom_call.1} parent=5 // pred_check_branch
        %99 = sbr.rel (%p96) target = $region12
      $region11: #{tpu_custom_call.1} parent=5 // pred_region
        %s100 = ssub.s32 %s18, 1
        // Predicated region
        $region13: #{tpu_custom_call.1} parent=11 // pred_check
          %p101 = pneg %p39
        $region14: #{tpu_custom_call.1} parent=11 // pred_check_branch
          %103 = sbr.rel (%p101) target = $region16
        $region15: #{tpu_custom_call.1} parent=11 // pred_region
          %s105 = ssub.s32 16, 16
          %106 = vsyncadd [#allocation7], %s105
          %s108 = sshll.u32 %s1, 4
          %s109 = int_to_ptr.vmem [resolvable:$true] %s108
          %111 = dma.vmem_to_smem %s109, 16, [#allocation4], [#allocation7]
        $region16: #{tpu_custom_call.1} parent=11 // pred_fallthru
          _
        // Predicated region
        $region17: #{tpu_custom_call.1} parent=11 // pred_check
          %p112 = pneg %p60
        $region18: #{tpu_custom_call.1} parent=11 // pred_check_branch
          %114 = sbr.rel (%p112) target = $region20
        $region19: #{tpu_custom_call.1} parent=11 // pred_region
          %s116 = ssub.s32 224, 224
          %117 = vsyncadd [#allocation5], %s116
          %s118 = sshll.u32 [#allocation8], 4
          %s119 = int_to_ptr.vmem [resolvable:$true] %s118
          %124 = dma.hbm_to_vmem [thread:$0]  %s2, 224, %s119, [#allocation5], 16, 16, 1
        $region20: #{tpu_custom_call.1} parent=11 // pred_fallthru
          _
      $region12: #{tpu_custom_call.1} parent=5 // pred_fallthru
        _
      %p125 = scmp.lt.s32.totalorder %s18, 2
      // Predicated region
      $region21: #{tpu_custom_call.1} parent=5 // pred_check
        %p126 = pneg %p125
      $region22: #{tpu_custom_call.1} parent=5 // pred_check_branch
        %128 = sbr.rel (%p126) target = $region24
      $region23: #{tpu_custom_call.1} parent=5 // pred_region
        _
      $region24: #{tpu_custom_call.1} parent=5 // pred_fallthru
        _
      %p129 = scmp.le.s32.totalorder 1, %s18
      %p130 = scmp.lt.s32.totalorder %s18, 3
      %p131 = pnand %p129, %p130
      %p132 = pneg %p131
      // Predicated region
      $region25: #{tpu_custom_call.1} parent=5 // pred_check
        _
      $region26: #{tpu_custom_call.1} parent=5 // pred_check_branch
        %134 = sbr.rel (%p131) target = $region28
      $region27: #{tpu_custom_call.1} parent=5 // pred_region
        %s135 = ssub.s32 %s18, 1
        // Predicated region
        $region29: #{tpu_custom_call.1} parent=27 // pred_check
          %p136 = pneg %p39
        $region30: #{tpu_custom_call.1} parent=27 // pred_check_branch
          %138 = sbr.rel (%p136) target = $region32
        $region31: #{tpu_custom_call.1} parent=27 // pred_region
          %139 = dma.done [#allocation7], 16
        $region32: #{tpu_custom_call.1} parent=27 // pred_fallthru
          _
        // Predicated region
        $region33: #{tpu_custom_call.1} parent=27 // pred_check
          %p140 = pneg %p60
        $region34: #{tpu_custom_call.1} parent=27 // pred_check_branch
          %142 = sbr.rel (%p140) target = $region36
        $region35: #{tpu_custom_call.1} parent=27 // pred_region
          %143 = dma.done [#allocation5], 224
        $region36: #{tpu_custom_call.1} parent=27 // pred_fallthru
          _
        %144 = sfence
        %p145 = pneg %p39
        %p146 = pneg %p36
        %p147 = pneg %p60
        %p148 = pneg %p57
        %p149 = pneg %p86
        %p150 = pneg %p83
        %s151 = sand.u32 %s73, 1
        %s152 = scalar_lea.sflag [#allocation6], %s151
        %s153 = sand.u32 %s73, 1
        %s154 = smul.addr %s153, 4
        %s155 = scalar_lea.vmem [#allocation9], %s154
        %s156 = smul.u32 4, %s23
        %s157 = smul.u32 %s23, 16
        %s158 = sld [smem:[#allocation3 + %s157]]
        %s159 = sld [smem:[#allocation4 + %s157]]
        %s160 = scalar_lea.vmem [#allocation8], %s158
        %v161 = vld [vmem:[%s160] sm:$0x1]
        %v162 = vstv %s159
        %v163 = vmul.f32 %v161, %v162
        %vm164 = vcmask 253952
        %165 = vst.msk [vmem:[%s155] sm:$0x1] %vm164, %v163
        %s166 = sadd.s32 %s157, 1
        %s167 = sld [smem:[#allocation3 + %s166]]
        %s168 = sld [smem:[#allocation4 + %s166]]
        %s169 = scalar_lea.vmem [#allocation8], %s167
        %v170 = vld [vmem:[%s169] sm:$0x1]
        %v171 = vstv %s168
        %v172 = vmul.f32 %v170, %v171
        %v174 = vlaneseq
        %v175 = vshrl.u32 %v174, 7
        %v176 = vsub.s32 0, %v175
        %v177 = vrot.slane %v172, %v176
        %178 = vrot.lane.b32.xlu0 %v177, 32
        %v179 = vpop.permute.xlu0 %178
        %vm181 = vcmask 516352
        %182 = vst.msk [vmem:[%s155] sm:$0x1] %vm181, %v179
        %s183 = sadd.s32 %s157, 2
        %s184 = sld [smem:[#allocation3 + %s183]]
        %s185 = sld [smem:[#allocation4 + %s183]]
        %s186 = scalar_lea.vmem [#allocation8], %s184
        %v187 = vld [vmem:[%s186] sm:$0x1]
        %v188 = vstv %s185
        %v189 = vmul.f32 %v187, %v188
        %v191 = vlaneseq
        %v192 = vshrl.u32 %v191, 7
        %v193 = vsub.s32 0, %v192
        %v194 = vrot.slane %v189, %v193
        %195 = vrot.lane.b32.xlu0 %v194, 64
        %v196 = vpop.permute.xlu0 %195
        %vm198 = vcmask 778752
        %199 = vst.msk [vmem:[%s155] sm:$0x1] %vm198, %v196
        %s200 = sadd.s32 %s157, 3
        %s201 = sld [smem:[#allocation3 + %s200]]
        %s202 = sld [smem:[#allocation4 + %s200]]
        %s203 = scalar_lea.vmem [#allocation8], %s201
        %v204 = vld [vmem:[%s203] sm:$0x1]
        %v205 = vstv %s202
        %v206 = vmul.f32 %v204, %v205
        %v208 = vlaneseq
        %v209 = vshrl.u32 %v208, 7
        %v210 = vsub.s32 0, %v209
        %v211 = vrot.slane %v206, %v210
        %212 = vrot.lane.b32.xlu0 %v211, 96
        %v213 = vpop.permute.xlu0 %212
        %vm215 = vcmask 1041152
        %216 = vst.msk [vmem:[%s155] sm:$0x1] %vm215, %v213
        %s217 = sadd.s32 %s157, 4
        %s218 = sld [smem:[#allocation3 + %s217]]
        %s219 = sld [smem:[#allocation4 + %s217]]
        %s220 = scalar_lea.vmem [#allocation8], %s218
        %v221 = vld [vmem:[%s220] sm:$0x1]
        %v222 = vstv %s219
        %v223 = vmul.f32 %v221, %v222
        %s224 = scalar_lea.vmem %s155, 1 [#allocation9]
        %225 = vst.msk [vmem:[%s224] sm:$0x1] %vm164, %v223
        %s226 = sadd.s32 %s157, 5
        %s227 = sld [smem:[#allocation3 + %s226]]
        %s228 = sld [smem:[#allocation4 + %s226]]
        %s229 = scalar_lea.vmem [#allocation8], %s227
        %v230 = vld [vmem:[%s229] sm:$0x1]
        %v231 = vstv %s228
        %v232 = vmul.f32 %v230, %v231
        %v234 = vlaneseq
        %v235 = vshrl.u32 %v234, 7
        %v236 = vsub.s32 0, %v235
        %v237 = vrot.slane %v232, %v236
        %238 = vrot.lane.b32.xlu0 %v237, 32
        %v239 = vpop.permute.xlu0 %238
        %241 = vst.msk [vmem:[%s224] sm:$0x1] %vm181, %v239
        %s242 = sadd.s32 %s157, 6
        %s243 = sld [smem:[#allocation3 + %s242]]
        %s244 = sld [smem:[#allocation4 + %s242]]
        %s245 = scalar_lea.vmem [#allocation8], %s243
        %v246 = vld [vmem:[%s245] sm:$0x1]
        %v247 = vstv %s244
        %v248 = vmul.f32 %v246, %v247
        %v250 = vlaneseq
        %v251 = vshrl.u32 %v250, 7
        %v252 = vsub.s32 0, %v251
        %v253 = vrot.slane %v248, %v252
        %254 = vrot.lane.b32.xlu0 %v253, 64
        %v255 = vpop.permute.xlu0 %254
        %257 = vst.msk [vmem:[%s224] sm:$0x1] %vm198, %v255
        %s258 = sadd.s32 %s157, 7
        %s259 = sld [smem:[#allocation3 + %s258]]
        %s260 = sld [smem:[#allocation4 + %s258]]
        %s261 = scalar_lea.vmem [#allocation8], %s259
        %v262 = vld [vmem:[%s261] sm:$0x1]
        %v263 = vstv %s260
        %v264 = vmul.f32 %v262, %v263
        %v266 = vlaneseq
        %v267 = vshrl.u32 %v266, 7
        %v268 = vsub.s32 0, %v267
        %v269 = vrot.slane %v264, %v268
        %270 = vrot.lane.b32.xlu0 %v269, 96
        %v271 = vpop.permute.xlu0 %270
        %273 = vst.msk [vmem:[%s224] sm:$0x1] %vm215, %v271
        %s274 = sadd.s32 %s157, 8
        %s275 = sld [smem:[#allocation3 + %s274]]
        %s276 = sld [smem:[#allocation4 + %s274]]
        %s277 = scalar_lea.vmem [#allocation8], %s275
        %v278 = vld [vmem:[%s277] sm:$0x1]
        %v279 = vstv %s276
        %v280 = vmul.f32 %v278, %v279
        %s281 = scalar_lea.vmem %s155, 2 [#allocation9]
        %282 = vst.msk [vmem:[%s281] sm:$0x1] %vm164, %v280
        %s283 = sadd.s32 %s157, 9
        %s284 = sld [smem:[#allocation3 + %s283]]
        %s285 = sld [smem:[#allocation4 + %s283]]
        %s286 = scalar_lea.vmem [#allocation8], %s284
        %v287 = vld [vmem:[%s286] sm:$0x1]
        %v288 = vstv %s285
        %v289 = vmul.f32 %v287, %v288
        %v291 = vlaneseq
        %v292 = vshrl.u32 %v291, 7
        %v293 = vsub.s32 0, %v292
        %v294 = vrot.slane %v289, %v293
        %295 = vrot.lane.b32.xlu0 %v294, 32
        %v296 = vpop.permute.xlu0 %295
        %298 = vst.msk [vmem:[%s281] sm:$0x1] %vm181, %v296
        %s299 = sadd.s32 %s157, 10
        %s300 = sld [smem:[#allocation3 + %s299]]
        %s301 = sld [smem:[#allocation4 + %s299]]
        %s302 = scalar_lea.vmem [#allocation8], %s300
        %v303 = vld [vmem:[%s302] sm:$0x1]
        %v304 = vstv %s301
        %v305 = vmul.f32 %v303, %v304
        %v307 = vlaneseq
        %v308 = vshrl.u32 %v307, 7
        %v309 = vsub.s32 0, %v308
        %v310 = vrot.slane %v305, %v309
        %311 = vrot.lane.b32.xlu0 %v310, 64
        %v312 = vpop.permute.xlu0 %311
        %314 = vst.msk [vmem:[%s281] sm:$0x1] %vm198, %v312
        %s315 = sadd.s32 %s157, 11
        %s316 = sld [smem:[#allocation3 + %s315]]
        %s317 = sld [smem:[#allocation4 + %s315]]
        %s318 = scalar_lea.vmem [#allocation8], %s316
        %v319 = vld [vmem:[%s318] sm:$0x1]
        %v320 = vstv %s317
        %v321 = vmul.f32 %v319, %v320
        %v323 = vlaneseq
        %v324 = vshrl.u32 %v323, 7
        %v325 = vsub.s32 0, %v324
        %v326 = vrot.slane %v321, %v325
        %327 = vrot.lane.b32.xlu0 %v326, 96
        %v328 = vpop.permute.xlu0 %327
        %330 = vst.msk [vmem:[%s281] sm:$0x1] %vm215, %v328
        %s331 = sadd.s32 %s157, 12
        %s332 = sld [smem:[#allocation3 + %s331]]
        %s333 = sld [smem:[#allocation4 + %s331]]
        %s334 = scalar_lea.vmem [#allocation8], %s332
        %v335 = vld [vmem:[%s334] sm:$0x1]
        %v336 = vstv %s333
        %v337 = vmul.f32 %v335, %v336
        %s338 = scalar_lea.vmem %s155, 3 [#allocation9]
        %339 = vst.msk [vmem:[%s338] sm:$0x1] %vm164, %v337
        %s340 = sadd.s32 %s157, 13
        %s341 = sld [smem:[#allocation3 + %s340]]
        %s342 = sld [smem:[#allocation4 + %s340]]
        %s343 = scalar_lea.vmem [#allocation8], %s341
        %v344 = vld [vmem:[%s343] sm:$0x1]
        %v345 = vstv %s342
        %v346 = vmul.f32 %v344, %v345
        %v348 = vlaneseq
        %v349 = vshrl.u32 %v348, 7
        %v350 = vsub.s32 0, %v349
        %v351 = vrot.slane %v346, %v350
        %352 = vrot.lane.b32.xlu0 %v351, 32
        %v353 = vpop.permute.xlu0 %352
        %355 = vst.msk [vmem:[%s338] sm:$0x1] %vm181, %v353
        %s356 = sadd.s32 %s157, 14
        %s357 = sld [smem:[#allocation3 + %s356]]
        %s358 = sld [smem:[#allocation4 + %s356]]
        %s359 = scalar_lea.vmem [#allocation8], %s357
        %v360 = vld [vmem:[%s359] sm:$0x1]
        %v361 = vstv %s358
        %v362 = vmul.f32 %v360, %v361
        %v364 = vlaneseq
        %v365 = vshrl.u32 %v364, 7
        %v366 = vsub.s32 0, %v365
        %v367 = vrot.slane %v362, %v366
        %368 = vrot.lane.b32.xlu0 %v367, 64
        %v369 = vpop.permute.xlu0 %368
        %371 = vst.msk [vmem:[%s338] sm:$0x1] %vm198, %v369
        %s372 = sadd.s32 %s157, 15
        %s373 = sld [smem:[#allocation3 + %s372]]
        %s374 = sld [smem:[#allocation4 + %s372]]
        %s375 = scalar_lea.vmem [#allocation8], %s373
        %v376 = vld [vmem:[%s375] sm:$0x1]
        %v377 = vstv %s374
        %v378 = vmul.f32 %v376, %v377
        %v380 = vlaneseq
        %v381 = vshrl.u32 %v380, 7
        %v382 = vsub.s32 0, %v381
        %v383 = vrot.slane %v378, %v382
        %384 = vrot.lane.b32.xlu0 %v383, 96
        %v385 = vpop.permute.xlu0 %384
        %387 = vst.msk [vmem:[%s338] sm:$0x1] %vm215, %v385
        %s388 = sand.u32 %s73, 1
        %s389 = scalar_lea.sflag [#allocation6], %s388
        %s390 = sand.u32 %s73, 1
        %s391 = smul.addr %s390, 4
        %s392 = scalar_lea.vmem [#allocation9], %s391
        // Predicated region
        $region37: #{tpu_custom_call.1} parent=27 // pred_check
          %p393 = pneg %p83
        $region38: #{tpu_custom_call.1} parent=27 // pred_check_branch
          %395 = sbr.rel (%p393) target = $region40
        $region39: #{tpu_custom_call.1} parent=27 // pred_region
          %s396 = smul.u32 4, %s23
          %s398 = ssub.s32 64, 64
          %399 = vsyncadd %s389, %s398
          %s400 = smul.addr %s396, 16
          %s401 = scalar_lea.hbm %s3, %s400
          %s402 = sshll.u32 %s392, 4
          %s403 = int_to_ptr.vmem [resolvable:$true] %s402
          %408 = dma.vmem_to_hbm [thread:$0]  %s403, 64, %s401, %s389, 16, 16, 1
        $region40: #{tpu_custom_call.1} parent=27 // pred_fallthru
          _
      $region28: #{tpu_custom_call.1} parent=5 // pred_fallthru
        _
      %p409 = scmp.le.s32.totalorder 2, %s18
      // Predicated region
      $region41: #{tpu_custom_call.1} parent=5 // pred_check
        %p410 = pneg %p409
      $region42: #{tpu_custom_call.1} parent=5 // pred_check_branch
        %412 = sbr.rel (%p410) target = $region44
      $region43: #{tpu_custom_call.1} parent=5 // pred_region
        %s413 = ssub.s32 %s18, 2
        // Predicated region
        $region45: #{tpu_custom_call.1} parent=43 // pred_check
          %p414 = pneg %p89
        $region46: #{tpu_custom_call.1} parent=43 // pred_check_branch
          %416 = sbr.rel (%p414) target = $region48
        $region47: #{tpu_custom_call.1} parent=43 // pred_region
          %s417 = sand.u32 %s74, 1
          %s418 = scalar_lea.sflag [#allocation6], %s417
          %s419 = sand.u32 %s74, 1
          %s420 = smul.addr %s419, 4
          %s421 = scalar_lea.vmem [#allocation9], %s420
          %422 = dma.done %s418, 64
        $region48: #{tpu_custom_call.1} parent=43 // pred_fallthru
          _
      $region44: #{tpu_custom_call.1} parent=5 // pred_fallthru
        _
    $region6: #{tpu_custom_call.1} parent=1 // loop_footer
      %s22 = sadd.s32 1, %s18
    $region7: #{tpu_custom_call.1} parent=1 // loop_footer_branch
      %17 = sbr.rel target = $region3
    $region8: #{tpu_custom_call.1} parent=1 // loop_exit
      _
    %423 = vsyncpa [#allocation5], 1
    %s424 = scalar_lea.sflag [#allocation5], 1
    %425 = vsyncpa %s424, 1
    %426 = vsyncpa [#allocation6], 1
    %s427 = scalar_lea.sflag [#allocation6], 1
    %428 = vsyncpa %s427, 1
    %429 = vsyncpa [#allocation7], 1
    %s430 = scalar_lea.sflag [#allocation7], 1
    %431 = vsyncpa %s430, 1

</llo_original>
